<compile_context>
chip_gen: v7x
topology: tpu7x:2x2x1
jax: 0.10.0
libtpu: 0.0.40
codegen_flags: <defaults>
</compile_context>

<pallas_src>
import jax
import jax.numpy as jnp
from jax.experimental import pallas as pl
from jax.experimental.pallas import tpu as pltpu


def _round_up(n, m):
    return ((n + m - 1) // m) * m


def _pad_to(x, shape):
    pads = [(0, s - d) for d, s in zip(x.shape, shape)]
    return jnp.pad(x, pads)


def textrnn_kernel(ids_ref, h0_ref, emb_ref, whh_ref, wout_ref, bout_ref, y_ref):
    # ids_ref:  SMEM [seq, batch_p] int32   (token ids, padded batch rows -> 0)
    # h0_ref:   VMEM [batch_p, hid_p]
    # emb_ref:  VMEM [vocab_p, hid_p]       (W_ih^T with (b_ih + b_hh) folded in)
    # whh_ref:  VMEM [hid_p, hid_p]         (W_hh^T)
    # wout_ref: VMEM [hid_p, vocab_p]       (W_out^T)
    # bout_ref: VMEM [1, vocab_p]
    # y_ref:    VMEM [batch_p, vocab_p]
    seq, batch_p = ids_ref.shape

    h = h0_ref[...]          # [batch_p, hid_p] — vreg-resident recurrence carry
    whh = whh_ref[...]       # hoisted once; only h @ W_hh is on the serial chain

    # TODO(synk): at realistic seq lengths, keep W_hh resident in the MXU weight
    # registers (pltpu.matmul_push_rhs once + matmul_acc_lhs/matmul_pop per step)
    # and switch to a bounded-unroll lax.fori_loop instead of full Python unroll.
    for t in range(seq):     # seq is tiny and static -> full unroll is fine here
        # Embedding gather: the one-hot x_t @ W_ih^T matmul in disguise.
        # One dynamic row load per batch element; bias is already folded into
        # the table, so no per-step bias add is needed.
        rows = [emb_ref[pl.ds(ids_ref[t, b], 1), :] for b in range(batch_p)]
        p_t = jnp.concatenate(rows, axis=0)          # [batch_p, hid_p]
        pre = jnp.dot(h, whh, preferred_element_type=jnp.float32) + p_t
        h = jnp.tanh(pre)

    # Output projection on the last hidden state only (multi-to-one).
    # TODO(synk): for production-scale vocab, grid over the vocab axis
    # (BlockSpec((hp, TILE_V), lambda v: (0, v)), dimension_semantics=("parallel",))
    # so v7x's two TensorCores split the weight-streaming work, and cast the
    # weights to bf16 (keep f32 accumulation) to halve HBM/VMEM traffic.
    y_ref[...] = (jnp.dot(h, wout_ref[...], preferred_element_type=jnp.float32)
                  + bout_ref[...])


def textrnn_forward(X, hidden, params):
    """X: [batch, n_step, num_words] one-hot rows; hidden: [1, batch, hidden]."""
    W_ih, W_hh, b_ih, b_hh, W_out, b_out = params
    batch, seq, vocab = X.shape
    hid = W_hh.shape[0]

    # One-hot input -> integer token ids (exact for the tutorial's np.eye()
    # batches).  The heavy [batch, seq, vocab] tensor never enters the kernel,
    # so no time-major HBM copy of X is materialized either.
    ids = jnp.argmax(X, axis=-1).astype(jnp.int32).T          # [seq, batch]

    # Pad to (sublane=8, lane=128) multiples so matmuls/stores are unmasked.
    bp = _round_up(batch, 8)
    hp = _round_up(hid, 128)
    vp = _round_up(vocab, 128)

    ids_p = _pad_to(ids, (seq, bp))                            # padded ids -> 0
    h0_p = _pad_to(hidden[0].astype(jnp.float32), (bp, hp))
    # Embedding table = W_ih^T with the fused RNN bias folded into every row:
    #   x_t @ W_ih^T + b_ih + b_hh == (W_ih^T + (b_ih + b_hh))[token_id]
    emb_p = (_pad_to(W_ih.T.astype(jnp.float32), (vp, hp))
             + _pad_to((b_ih + b_hh).reshape(1, hid).astype(jnp.float32), (1, hp)))
    whh_p = _pad_to(W_hh.T.astype(jnp.float32), (hp, hp))
    wout_p = _pad_to(W_out.T.astype(jnp.float32), (hp, vp))
    bout_p = _pad_to(b_out.reshape(1, vocab).astype(jnp.float32), (1, vp))

    # Zero padding is exact for the *valid* rows/cols: padded hidden units keep
    # pre-activation 0 -> tanh(0) = 0 and multiply zero weight rows, so they
    # never contaminate valid outputs.  NOTE: padded *batch* rows do accumulate
    # nonzero values through the recurrence (they gather token 0 + bias); they
    # are independent per row and are sliced off below — do not reduce over the
    # batch dimension inside the kernel without masking them first.

    cost = pl.CostEstimate(
        flops=2 * seq * bp * hp * hp + 2 * bp * hp * vp,
        transcendentals=seq * bp * hp,
        bytes_accessed=4 * (ids_p.size + h0_p.size + emb_p.size + whh_p.size
                            + wout_p.size + bout_p.size + bp * vp),
    )

    smem = pl.BlockSpec(memory_space=pltpu.MemorySpace.SMEM)
    vmem = pl.BlockSpec(memory_space=pltpu.MemorySpace.VMEM)
    y_p = pl.pallas_call(
        textrnn_kernel,
        out_shape=jax.ShapeDtypeStruct((bp, vp), jnp.float32),
        in_specs=[smem, vmem, vmem, vmem, vmem, vmem],
        out_specs=vmem,
        cost_estimate=cost,
    )(ids_p, h0_p, emb_p, whh_p, wout_p, bout_p)

    return y_p[:batch, :vocab]


def textrnn_reference(X, hidden, params):
    """Pure-JAX reference mirroring torch nn.RNN + Linear + bias (full matmul path)."""
    W_ih, W_hh, b_ih, b_hh, W_out, b_out = params
    x_tm = jnp.transpose(X, (1, 0, 2))
    h = hidden[0]
    for t in range(x_tm.shape[0]):
        h = jnp.tanh(x_tm[t] @ W_ih.T + b_ih + h @ W_hh.T + b_hh)
    return h @ W_out.T + b_out


if __name__ == "__main__":
    # Shapes mirroring the tutorial: n_step=2, batch=5, num_words=8, hidden_size=4
    n_step, batch, num_words, hidden_size = 2, 5, 8, 4

    key = jax.random.PRNGKey(0)
    ks = jax.random.split(key, 7)

    # Deterministic synthetic parameters (shapes match nn.RNN / nn.Linear / Parameter).
    W_ih = jax.random.normal(ks[0], (hidden_size, num_words), jnp.float32) * 0.1
    W_hh = jax.random.normal(ks[1], (hidden_size, hidden_size), jnp.float32) * 0.1
    b_ih = jax.random.normal(ks[2], (hidden_size,), jnp.float32) * 0.1
    b_hh = jax.random.normal(ks[3], (hidden_size,), jnp.float32) * 0.1
    W_out = jax.random.normal(ks[4], (num_words, hidden_size), jnp.float32) * 0.1
    b_out = jnp.ones((num_words,), jnp.float32)      # self.bias = ones([num_words])
    params = (W_ih, W_hh, b_ih, b_hh, W_out, b_out)

    # Tutorial inputs are one-hot rows of np.eye(num_words): build them from ids.
    tok = jax.random.randint(ks[5], (batch, n_step), 0, num_words)
    X = jax.nn.one_hot(tok, num_words, dtype=jnp.float32)   # [batch, n_step, vocab]
    hidden = jnp.zeros((1, batch, hidden_size), jnp.float32)

    y = textrnn_forward(X, hidden, params)
    jax.block_until_ready(y)

    y_ref = textrnn_reference(X, hidden, params)
    assert y.shape == (batch, num_words)
    assert jnp.allclose(y, y_ref, atol=1e-5, rtol=1e-5), "mismatch vs reference"

    print("KERNEL_OK")
</pallas_src>

<mosaic_0001>
module attributes {stable_mosaic.version = 11 : i64} {
  func.func @textrnn_kernel(%arg0: memref<2x8xi32, #tpu.memory_space<smem>>, %arg1: memref<8x128xf32, #tpu.memory_space<vmem>>, %arg2: memref<128x128xf32, #tpu.memory_space<vmem>>, %arg3: memref<128x128xf32, #tpu.memory_space<vmem>>, %arg4: memref<128x128xf32, #tpu.memory_space<vmem>>, %arg5: memref<1x128xf32, #tpu.memory_space<vmem>>, %arg6: memref<8x128xf32, #tpu.memory_space<vmem>>) attributes {dimension_semantics = [], scalar_prefetch = 0 : i64, scratch_operands = 0 : i64, tpu.core_type = #tpu.core_type<tc>} {
    %c0 = arith.constant 0 : index
    %c0_0 = arith.constant 0 : index
    %0 = vector.load %arg1[%c0, %c0_0] : memref<8x128xf32, #tpu.memory_space<vmem>>, vector<8x128xf32>
    %c0_1 = arith.constant 0 : index
    %c0_2 = arith.constant 0 : index
    %1 = vector.load %arg3[%c0_1, %c0_2] : memref<128x128xf32, #tpu.memory_space<vmem>>, vector<128x128xf32>
    %c0_3 = arith.constant 0 : index
    %c0_4 = arith.constant 0 : index
    %2 = memref.load %arg0[%c0_3, %c0_4] : memref<2x8xi32, #tpu.memory_space<smem>>
    %3 = arith.index_cast %2 : i32 to index
    %c0_5 = arith.constant 0 : index
    %4 = vector.load %arg2[%3, %c0_5] : memref<128x128xf32, #tpu.memory_space<vmem>>, vector<1x128xf32>
    %c0_6 = arith.constant 0 : index
    %c1 = arith.constant 1 : index
    %5 = memref.load %arg0[%c0_6, %c1] : memref<2x8xi32, #tpu.memory_space<smem>>
    %6 = arith.index_cast %5 : i32 to index
    %c0_7 = arith.constant 0 : index
    %7 = vector.load %arg2[%6, %c0_7] : memref<128x128xf32, #tpu.memory_space<vmem>>, vector<1x128xf32>
    %c0_8 = arith.constant 0 : index
    %c2 = arith.constant 2 : index
    %8 = memref.load %arg0[%c0_8, %c2] : memref<2x8xi32, #tpu.memory_space<smem>>
    %9 = arith.index_cast %8 : i32 to index
    %c0_9 = arith.constant 0 : index
    %10 = vector.load %arg2[%9, %c0_9] : memref<128x128xf32, #tpu.memory_space<vmem>>, vector<1x128xf32>
    %c0_10 = arith.constant 0 : index
    %c3 = arith.constant 3 : index
    %11 = memref.load %arg0[%c0_10, %c3] : memref<2x8xi32, #tpu.memory_space<smem>>
    %12 = arith.index_cast %11 : i32 to index
    %c0_11 = arith.constant 0 : index
    %13 = vector.load %arg2[%12, %c0_11] : memref<128x128xf32, #tpu.memory_space<vmem>>, vector<1x128xf32>
    %c0_12 = arith.constant 0 : index
    %c4 = arith.constant 4 : index
    %14 = memref.load %arg0[%c0_12, %c4] : memref<2x8xi32, #tpu.memory_space<smem>>
    %15 = arith.index_cast %14 : i32 to index
    %c0_13 = arith.constant 0 : index
    %16 = vector.load %arg2[%15, %c0_13] : memref<128x128xf32, #tpu.memory_space<vmem>>, vector<1x128xf32>
    %c0_14 = arith.constant 0 : index
    %c5 = arith.constant 5 : index
    %17 = memref.load %arg0[%c0_14, %c5] : memref<2x8xi32, #tpu.memory_space<smem>>
    %18 = arith.index_cast %17 : i32 to index
    %c0_15 = arith.constant 0 : index
    %19 = vector.load %arg2[%18, %c0_15] : memref<128x128xf32, #tpu.memory_space<vmem>>, vector<1x128xf32>
    %c0_16 = arith.constant 0 : index
    %c6 = arith.constant 6 : index
    %20 = memref.load %arg0[%c0_16, %c6] : memref<2x8xi32, #tpu.memory_space<smem>>
    %21 = arith.index_cast %20 : i32 to index
    %c0_17 = arith.constant 0 : index
    %22 = vector.load %arg2[%21, %c0_17] : memref<128x128xf32, #tpu.memory_space<vmem>>, vector<1x128xf32>
    %c0_18 = arith.constant 0 : index
    %c7 = arith.constant 7 : index
    %23 = memref.load %arg0[%c0_18, %c7] : memref<2x8xi32, #tpu.memory_space<smem>>
    %24 = arith.index_cast %23 : i32 to index
    %c0_19 = arith.constant 0 : index
    %25 = vector.load %arg2[%24, %c0_19] : memref<128x128xf32, #tpu.memory_space<vmem>>, vector<1x128xf32>
    %26 = tpu.concatenate %4, %7, %10, %13, %16, %19, %22, %25 in 0 : vector<1x128xf32>, vector<1x128xf32>, vector<1x128xf32>, vector<1x128xf32>, vector<1x128xf32>, vector<1x128xf32>, vector<1x128xf32>, vector<1x128xf32> -> vector<8x128xf32>
    %cst = arith.constant dense<0.000000e+00> : vector<8x128xf32>
    %27 = tpu.matmul %0, %1, %cst {dimension_numbers = #tpu.dot_dimension_numbers<[1], [0], [0], [1], [0, 0, 1, 1], [], []>} : vector<8x128xf32>, vector<128x128xf32>, vector<8x128xf32> -> vector<8x128xf32>
    %28 = arith.addf %27, %26 : vector<8x128xf32>
    %29 = math.tanh %28 : vector<8x128xf32>
    %c1_20 = arith.constant 1 : index
    %c0_21 = arith.constant 0 : index
    %30 = memref.load %arg0[%c1_20, %c0_21] : memref<2x8xi32, #tpu.memory_space<smem>>
    %31 = arith.index_cast %30 : i32 to index
    %c0_22 = arith.constant 0 : index
    %32 = vector.load %arg2[%31, %c0_22] : memref<128x128xf32, #tpu.memory_space<vmem>>, vector<1x128xf32>
    %c1_23 = arith.constant 1 : index
    %c1_24 = arith.constant 1 : index
    %33 = memref.load %arg0[%c1_23, %c1_24] : memref<2x8xi32, #tpu.memory_space<smem>>
    %34 = arith.index_cast %33 : i32 to index
    %c0_25 = arith.constant 0 : index
    %35 = vector.load %arg2[%34, %c0_25] : memref<128x128xf32, #tpu.memory_space<vmem>>, vector<1x128xf32>
    %c1_26 = arith.constant 1 : index
    %c2_27 = arith.constant 2 : index
    %36 = memref.load %arg0[%c1_26, %c2_27] : memref<2x8xi32, #tpu.memory_space<smem>>
    %37 = arith.index_cast %36 : i32 to index
    %c0_28 = arith.constant 0 : index
    %38 = vector.load %arg2[%37, %c0_28] : memref<128x128xf32, #tpu.memory_space<vmem>>, vector<1x128xf32>
    %c1_29 = arith.constant 1 : index
    %c3_30 = arith.constant 3 : index
    %39 = memref.load %arg0[%c1_29, %c3_30] : memref<2x8xi32, #tpu.memory_space<smem>>
    %40 = arith.index_cast %39 : i32 to index
    %c0_31 = arith.constant 0 : index
    %41 = vector.load %arg2[%40, %c0_31] : memref<128x128xf32, #tpu.memory_space<vmem>>, vector<1x128xf32>
    %c1_32 = arith.constant 1 : index
    %c4_33 = arith.constant 4 : index
    %42 = memref.load %arg0[%c1_32, %c4_33] : memref<2x8xi32, #tpu.memory_space<smem>>
    %43 = arith.index_cast %42 : i32 to index
    %c0_34 = arith.constant 0 : index
    %44 = vector.load %arg2[%43, %c0_34] : memref<128x128xf32, #tpu.memory_space<vmem>>, vector<1x128xf32>
    %c1_35 = arith.constant 1 : index
    %c5_36 = arith.constant 5 : index
    %45 = memref.load %arg0[%c1_35, %c5_36] : memref<2x8xi32, #tpu.memory_space<smem>>
    %46 = arith.index_cast %45 : i32 to index
    %c0_37 = arith.constant 0 : index
    %47 = vector.load %arg2[%46, %c0_37] : memref<128x128xf32, #tpu.memory_space<vmem>>, vector<1x128xf32>
    %c1_38 = arith.constant 1 : index
    %c6_39 = arith.constant 6 : index
    %48 = memref.load %arg0[%c1_38, %c6_39] : memref<2x8xi32, #tpu.memory_space<smem>>
    %49 = arith.index_cast %48 : i32 to index
    %c0_40 = arith.constant 0 : index
    %50 = vector.load %arg2[%49, %c0_40] : memref<128x128xf32, #tpu.memory_space<vmem>>, vector<1x128xf32>
    %c1_41 = arith.constant 1 : index
    %c7_42 = arith.constant 7 : index
    %51 = memref.load %arg0[%c1_41, %c7_42] : memref<2x8xi32, #tpu.memory_space<smem>>
    %52 = arith.index_cast %51 : i32 to index
    %c0_43 = arith.constant 0 : index
    %53 = vector.load %arg2[%52, %c0_43] : memref<128x128xf32, #tpu.memory_space<vmem>>, vector<1x128xf32>
    %54 = tpu.concatenate %32, %35, %38, %41, %44, %47, %50, %53 in 0 : vector<1x128xf32>, vector<1x128xf32>, vector<1x128xf32>, vector<1x128xf32>, vector<1x128xf32>, vector<1x128xf32>, vector<1x128xf32>, vector<1x128xf32> -> vector<8x128xf32>
    %cst_44 = arith.constant dense<0.000000e+00> : vector<8x128xf32>
    %55 = tpu.matmul %29, %1, %cst_44 {dimension_numbers = #tpu.dot_dimension_numbers<[1], [0], [0], [1], [0, 0, 1, 1], [], []>} : vector<8x128xf32>, vector<128x128xf32>, vector<8x128xf32> -> vector<8x128xf32>
    %56 = arith.addf %55, %54 : vector<8x128xf32>
    %57 = math.tanh %56 : vector<8x128xf32>
    %c0_45 = arith.constant 0 : index
    %c0_46 = arith.constant 0 : index
    %58 = vector.load %arg4[%c0_45, %c0_46] : memref<128x128xf32, #tpu.memory_space<vmem>>, vector<128x128xf32>
    %cst_47 = arith.constant dense<0.000000e+00> : vector<8x128xf32>
    %59 = tpu.matmul %57, %58, %cst_47 {dimension_numbers = #tpu.dot_dimension_numbers<[1], [0], [0], [1], [0, 0, 1, 1], [], []>} : vector<8x128xf32>, vector<128x128xf32>, vector<8x128xf32> -> vector<8x128xf32>
    %c0_48 = arith.constant 0 : index
    %c0_49 = arith.constant 0 : index
    %60 = vector.load %arg5[%c0_48, %c0_49] : memref<1x128xf32, #tpu.memory_space<vmem>>, vector<1x128xf32>
    %61 = vector.broadcast %60 : vector<1x128xf32> to vector<8x128xf32>
    %62 = arith.addf %59, %61 : vector<8x128xf32>
    %c0_50 = arith.constant 0 : index
    %c0_51 = arith.constant 0 : index
    %63 = vector.load %arg6[%c0_50, %c0_51] : memref<8x128xf32, #tpu.memory_space<vmem>>, vector<8x128xf32>
    tpu.vector_store %arg6[%c0_50, %c0_51], %62 {strides = array<i32>} : memref<8x128xf32, #tpu.memory_space<vmem>>, vector<8x128xf32>,
    return
  }
}

</mosaic_0001>

<llo_original>
// kernel: tpu_custom_call.1
$region0: #{tpu_custom_call.1}
  #allocation0 [shape = 'u32[]', space=smem, size = 0x4, offset = 0x4, fixed_abs, tag = 'smem constant byte address 0x4 - core index']
  #allocation1 [shape = 'u32[144,128]{1,0:T(1,128)}', space=vmem, size = 0x12000, scoped, tag = 'internal scratch']
  %s0 = inlined_call_operand.hbm [shape: s32[2,8], index: 0, kind: input, shape index: {}]
  %s1 = inlined_call_operand.hbm [shape: f32[8,128], index: 1, kind: input, shape index: {}]
  %s2 = inlined_call_operand.hbm [shape: f32[128,128], index: 2, kind: input, shape index: {}]
  %s3 = inlined_call_operand.hbm [shape: f32[128,128], index: 3, kind: input, shape index: {}]
  %s4 = inlined_call_operand.hbm [shape: f32[128,128], index: 4, kind: input, shape index: {}]
  %s5 = inlined_call_operand.vmem [shape: f32[1,128], index: 5, kind: input, shape index: {}]
  %s6 = inlined_call_operand.hbm [shape: f32[8,128], index: 6, kind: output, shape index: {}]
  %s7 = sld [smem:[#allocation0]]
  $region54: #{tpu_custom_call.1} parent=0
    _
  %s9 = ssub.s32 1, %s7
  %s10 = scalar_select 0, %s9, %s7
  $region1: #{tpu_custom_call.1} parent=0
    #allocation2 [shape = 'u8[1024]{0}', space=smem, size = 0x400, scoped, tag = 'input window, operand 0, single buffered']
    #allocation3 [shape = 's32[1]{0}', space=sflag, size = 0x4, scoped, tag = 'scoped memory for tpu_custom_call.1']
    #allocation4 [shape = 's32[1]{0}', space=sflag, size = 0x4, scoped, tag = 'scoped memory for tpu_custom_call.1']
    #allocation5 [shape = 's32[1]{0}', space=sflag, size = 0x4, scoped, tag = 'scoped memory for tpu_custom_call.1']
    #allocation6 [shape = 'u8[4096]{0}', space=vmem, size = 0x1000, scoped, tag = 'input window, operand 1, single buffered']
    #allocation7 [shape = 'u8[65536]{0}', space=vmem, size = 0x10000, scoped, tag = 'input window, operand 2, single buffered']
    #allocation8 [shape = 's32[1]{0}', space=sflag, size = 0x4, scoped, tag = 'scoped memory for tpu_custom_call.1']
    #allocation9 [shape = 'u8[65536]{0}', space=vmem, size = 0x10000, scoped, tag = 'input window, operand 3, single buffered']
    #allocation10 [shape = 'u8[65536]{0}', space=vmem, size = 0x10000, scoped, tag = 'input window, operand 4, single buffered']
    #allocation11 [shape = 's32[1]{0}', space=sflag, size = 0x4, scoped, tag = 'scoped memory for tpu_custom_call.1']
    #allocation12 [shape = 'u8[4096]{0}', space=vmem, size = 0x1000, scoped, tag = 'output window, operand 0, single buffered']
    %11 = vsyncpa [#allocation5], 0
    %12 = vsyncpa [#allocation3], 0
    %13 = vsyncpa [#allocation8], 0
    %14 = vsyncpa [#allocation11], 0
    %15 = vsyncpa [#allocation4], 0
    // Predicated region
    $region2: #{tpu_custom_call.1} parent=1 // pred_check
      _
    $region3: #{tpu_custom_call.1} parent=1 // pred_check_branch
      %17 = sbr.rel (0) target = $region5
    $region4: #{tpu_custom_call.1} parent=1 // pred_region
      %s19 = ssub.s32 32, 32
      %20 = vsyncadd [#allocation5], %s19
      %23 = dma.hbm_to_smem %s0, 32, [#allocation2], [#allocation5]
    $region5: #{tpu_custom_call.1} parent=1 // pred_fallthru
      _
    // Predicated region
    $region6: #{tpu_custom_call.1} parent=1 // pred_check
      _
    $region7: #{tpu_custom_call.1} parent=1 // pred_check_branch
      %25 = sbr.rel (0) target = $region9
    $region8: #{tpu_custom_call.1} parent=1 // pred_region
      %s27 = ssub.s32 128, 128
      %28 = vsyncadd [#allocation3], %s27
      %s30 = sshll.u32 [#allocation6], 4
      %s31 = int_to_ptr.vmem [resolvable:$true] %s30
      %33 = dma.hbm_to_vmem [thread:$0]  %s1, 128, %s31, [#allocation3]
    $region9: #{tpu_custom_call.1} parent=1 // pred_fallthru
      _
    // Predicated region
    $region10: #{tpu_custom_call.1} parent=1 // pred_check
      _
    $region11: #{tpu_custom_call.1} parent=1 // pred_check_branch
      %35 = sbr.rel (0) target = $region13
    $region12: #{tpu_custom_call.1} parent=1 // pred_region
      %s37 = ssub.s32 2048, 2048
      %38 = vsyncadd [#allocation8], %s37
      %s39 = sshll.u32 [#allocation7], 4
      %s40 = int_to_ptr.vmem [resolvable:$true] %s39
      %45 = dma.hbm_to_vmem [thread:$0]  %s2, 2048, %s40, [#allocation8], 128, 128, 8
    $region13: #{tpu_custom_call.1} parent=1 // pred_fallthru
      _
    // Predicated region
    $region14: #{tpu_custom_call.1} parent=1 // pred_check
      _
    $region15: #{tpu_custom_call.1} parent=1 // pred_check_branch
      %47 = sbr.rel (0) target = $region17
    $region16: #{tpu_custom_call.1} parent=1 // pred_region
      %s49 = ssub.s32 2048, 2048
      %50 = vsyncadd [#allocation8], %s49
      %s51 = sshll.u32 [#allocation9], 4
      %s52 = int_to_ptr.vmem [resolvable:$true] %s51
      %57 = dma.hbm_to_vmem [thread:$0]  %s3, 2048, %s52, [#allocation8], 128, 128, 8
    $region17: #{tpu_custom_call.1} parent=1 // pred_fallthru
      _
    // Predicated region
    $region18: #{tpu_custom_call.1} parent=1 // pred_check
      _
    $region19: #{tpu_custom_call.1} parent=1 // pred_check_branch
      %59 = sbr.rel (0) target = $region21
    $region20: #{tpu_custom_call.1} parent=1 // pred_region
      %s61 = ssub.s32 2048, 2048
      %62 = vsyncadd [#allocation11], %s61
      %s63 = sshll.u32 [#allocation10], 4
      %s64 = int_to_ptr.vmem [resolvable:$true] %s63
      %69 = dma.hbm_to_vmem [thread:$0]  %s4, 2048, %s64, [#allocation11], 128, 128, 8
    $region21: #{tpu_custom_call.1} parent=1 // pred_fallthru
      _
    // Predicated region
    $region22: #{tpu_custom_call.1} parent=1 // pred_check
      _
    $region23: #{tpu_custom_call.1} parent=1 // pred_check_branch
      %71 = sbr.rel (0) target = $region25
    $region24: #{tpu_custom_call.1} parent=1 // pred_region
      _
    $region25: #{tpu_custom_call.1} parent=1 // pred_fallthru
      _
    // Predicated region
    $region26: #{tpu_custom_call.1} parent=1 // pred_check
      _
    $region27: #{tpu_custom_call.1} parent=1 // pred_check_branch
      %73 = sbr.rel (0) target = $region29
    $region28: #{tpu_custom_call.1} parent=1 // pred_region
      %74 = dma.done [#allocation5], 32
    $region29: #{tpu_custom_call.1} parent=1 // pred_fallthru
      _
    // Predicated region
    $region30: #{tpu_custom_call.1} parent=1 // pred_check
      _
    $region31: #{tpu_custom_call.1} parent=1 // pred_check_branch
      %76 = sbr.rel (0) target = $region33
    $region32: #{tpu_custom_call.1} parent=1 // pred_region
      %77 = dma.done [#allocation3], 128
    $region33: #{tpu_custom_call.1} parent=1 // pred_fallthru
      _
    // Predicated region
    $region34: #{tpu_custom_call.1} parent=1 // pred_check
      _
    $region35: #{tpu_custom_call.1} parent=1 // pred_check_branch
      %79 = sbr.rel (0) target = $region37
    $region36: #{tpu_custom_call.1} parent=1 // pred_region
      %80 = dma.done [#allocation8], 2048
    $region37: #{tpu_custom_call.1} parent=1 // pred_fallthru
      _
    // Predicated region
    $region38: #{tpu_custom_call.1} parent=1 // pred_check
      _
    $region39: #{tpu_custom_call.1} parent=1 // pred_check_branch
      %82 = sbr.rel (0) target = $region41
    $region40: #{tpu_custom_call.1} parent=1 // pred_region
      %83 = dma.done [#allocation8], 2048
    $region41: #{tpu_custom_call.1} parent=1 // pred_fallthru
      _
    // Predicated region
    $region42: #{tpu_custom_call.1} parent=1 // pred_check
      _
    $region43: #{tpu_custom_call.1} parent=1 // pred_check_branch
      %85 = sbr.rel (0) target = $region45
    $region44: #{tpu_custom_call.1} parent=1 // pred_region
      %86 = dma.done [#allocation11], 2048
    $region45: #{tpu_custom_call.1} parent=1 // pred_fallthru
      _
    %87 = sfence
    %v88 = vld [vmem:[#allocation6] sm:$0xff]
    %v89 = vld [vmem:[#allocation9] sm:$0xff]
    %v90 = vld [vmem:[#allocation9 + $0x8] sm:$0xff]
    %v91 = vld [vmem:[#allocation9 + $0x10] sm:$0xff]
    %v92 = vld [vmem:[#allocation9 + $0x18] sm:$0xff]
    %v93 = vld [vmem:[#allocation9 + $0x20] sm:$0xff]
    %v94 = vld [vmem:[#allocation9 + $0x28] sm:$0xff]
    %v95 = vld [vmem:[#allocation9 + $0x30] sm:$0xff]
    %v96 = vld [vmem:[#allocation9 + $0x38] sm:$0xff]
    %v97 = vld [vmem:[#allocation9 + $0x40] sm:$0xff]
    %v98 = vld [vmem:[#allocation9 + $0x48] sm:$0xff]
    %v99 = vld [vmem:[#allocation9 + $0x50] sm:$0xff]
    %v100 = vld [vmem:[#allocation9 + $0x58] sm:$0xff]
    %v101 = vld [vmem:[#allocation9 + $0x60] sm:$0xff]
    %v102 = vld [vmem:[#allocation9 + $0x68] sm:$0xff]
    %v103 = vld [vmem:[#allocation9 + $0x70] sm:$0xff]
    %v104 = vld [vmem:[#allocation9 + $0x78] sm:$0xff]
    %s105 = sld [smem:[#allocation2]]
    %s106 = scalar_lea.vmem [#allocation7], %s105
    %v107 = vld [vmem:[%s106] sm:$0x1]
    %s108 = sld [smem:[#allocation2 + $0x1]]
    %s109 = scalar_lea.vmem [#allocation7], %s108
    %v110 = vld [vmem:[%s109] sm:$0x1]
    %s111 = sld [smem:[#allocation2 + $0x2]]
    %s112 = scalar_lea.vmem [#allocation7], %s111
    %v113 = vld [vmem:[%s112] sm:$0x1]
    %s114 = sld [smem:[#allocation2 + $0x3]]
    %s115 = scalar_lea.vmem [#allocation7], %s114
    %v116 = vld [vmem:[%s115] sm:$0x1]
    %s117 = sld [smem:[#allocation2 + $0x4]]
    %s118 = scalar_lea.vmem [#allocation7], %s117
    %v119 = vld [vmem:[%s118] sm:$0x1]
    %s120 = sld [smem:[#allocation2 + $0x5]]
    %s121 = scalar_lea.vmem [#allocation7], %s120
    %v122 = vld [vmem:[%s121] sm:$0x1]
    %s123 = sld [smem:[#allocation2 + $0x6]]
    %s124 = scalar_lea.vmem [#allocation7], %s123
    %v125 = vld [vmem:[%s124] sm:$0x1]
    %s126 = sld [smem:[#allocation2 + $0x7]]
    %s127 = scalar_lea.vmem [#allocation7], %s126
    %v128 = vld [vmem:[%s127] sm:$0x1]
    %v130 = vrot.slane %v110, 7
    %v133 = vrot.slane %v113, 6
    %v136 = vrot.slane %v116, 5
    %v139 = vrot.slane %v119, 4
    %v142 = vrot.slane %v122, 3
    %v145 = vrot.slane %v125, 2
    %v148 = vrot.slane %v128, 1
    %vm150 = vcmask 1040384
    %v151 = vsel %vm150, %v107, %v130
    %vm152 = vcmask 1041408
    %v153 = vsel %vm152, %v151, %v133
    %vm154 = vcmask 1042432
    %v155 = vsel %vm154, %v153, %v136
    %vm156 = vcmask 1043456
    %v157 = vsel %vm156, %v155, %v139
    %vm158 = vcmask 1044480
    %v159 = vsel %vm158, %v157, %v142
    %vm160 = vcmask 1045504
    %v161 = vsel %vm160, %v159, %v145
    %vm162 = vcmask 1046528
    %v163 = vsel %vm162, %v161, %v148
    %164 = vmatprep.subr.mxu0 0.0
    %165 = vmatpush1.msra.mxu0 %v89
    %166 = vmatprep.subr.mxu0 0.0
    %167 = vmatpush1.msra.mxu0 %v90
    %168 = vmatprep.subr.mxu0 0.0
    %169 = vmatpush1.msra.mxu0 %v91
    %170 = vmatprep.subr.mxu0 0.0
    %171 = vmatpush1.msra.mxu0 %v92
    %172 = vmatprep.subr.mxu0 0.0
    %173 = vmatpush1.msra.mxu0 %v93
    %174 = vmatprep.subr.mxu0 0.0
    %175 = vmatpush1.msra.mxu0 %v94
    %176 = vmatprep.subr.mxu0 0.0
    %177 = vmatpush1.msra.mxu0 %v95
    %178 = vmatprep.subr.mxu0 0.0
    %179 = vmatpush1.msra.mxu0 %v96
    %180 = vmatprep.subr.mxu0 0.0
    %181 = vmatpush1.msra.mxu0 %v97
    %182 = vmatprep.subr.mxu0 0.0
    %183 = vmatpush1.msra.mxu0 %v98
    %184 = vmatprep.subr.mxu0 0.0
    %185 = vmatpush1.msra.mxu0 %v99
    %186 = vmatprep.subr.mxu0 0.0
    %187 = vmatpush1.msra.mxu0 %v100
    %188 = vmatprep.subr.mxu0 0.0
    %189 = vmatpush1.msra.mxu0 %v101
    %190 = vmatprep.subr.mxu0 0.0
    %191 = vmatpush1.msra.mxu0 %v102
    %192 = vmatprep.subr.mxu0 0.0
    %193 = vmatpush1.msra.mxu0 %v103
    %194 = vmatprep.subr.mxu0 0.0
    %195 = vmatpush1.msra.mxu0 %v104
    %196 = vmatprep.subr.mxu0 0.0
    %197 = vmatpush1.msra.mxu0 0.0
    %198 = vmatprep.subr.mxu0 0.0
    %199 = vmatpush1.msra.mxu0 0.0
    %200 = vmatprep.subr.mxu0 0.0
    %201 = vmatpush1.msra.mxu0 0.0
    %202 = vmatprep.subr.mxu0 0.0
    %203 = vmatpush1.msra.mxu0 0.0
    %204 = vmatprep.subr.mxu0 0.0
    %205 = vmatpush1.msra.mxu0 0.0
    %206 = vmatprep.subr.mxu0 0.0
    %207 = vmatpush1.msra.mxu0 0.0
    %208 = vmatprep.subr.mxu0 0.0
    %209 = vmatpush1.msra.mxu0 0.0
    %210 = vmatprep.subr.mxu0 0.0
    %211 = vmatpush1.msra.mxu0 0.0
    %212 = vmatprep.subr.mxu0 0.0
    %213 = vmatpush1.msra.mxu0 0.0
    %214 = vmatprep.subr.mxu0 0.0
    %215 = vmatpush1.msra.mxu0 0.0
    %216 = vmatprep.subr.mxu0 0.0
    %217 = vmatpush1.msra.mxu0 0.0
    %218 = vmatprep.subr.mxu0 0.0
    %219 = vmatpush1.msra.mxu0 0.0
    %220 = vmatprep.subr.mxu0 0.0
    %221 = vmatpush1.msra.mxu0 0.0
    %222 = vmatprep.subr.mxu0 0.0
    %223 = vmatpush1.msra.mxu0 0.0
    %224 = vmatprep.subr.mxu0 0.0
    %225 = vmatpush1.msra.mxu0 0.0
    %226 = vmatprep.subr.mxu0 0.0
    %227 = vmatpush1.msra.mxu0 0.0
    %228 = vmatprep.mubr.f32.mxu0 0.0
    %229 = vmatmul.mubr.f32.gmra.mrb[0].mxu0 %v88
    %v230 = vpop.f32.mrb[0].mxu0
    %v231 = vadd.f32 %v163, %v230
    %v232 = vpop.f32.mrb[0].mxu0
    %233 = vdwg.mxu0
    %v234 = vtanh.pop %v231
    %s235 = sld [smem:[#allocation2 + $0x80]]
    %s236 = scalar_lea.vmem [#allocation7], %s235
    %v237 = vld [vmem:[%s236] sm:$0x1]
    %s238 = sld [smem:[#allocation2 + $0x81]]
    %s239 = scalar_lea.vmem [#allocation7], %s238
    %v240 = vld [vmem:[%s239] sm:$0x1]
    %s241 = sld [smem:[#allocation2 + $0x82]]
    %s242 = scalar_lea.vmem [#allocation7], %s241
    %v243 = vld [vmem:[%s242] sm:$0x1]
    %s244 = sld [smem:[#allocation2 + $0x83]]
    %s245 = scalar_lea.vmem [#allocation7], %s244
    %v246 = vld [vmem:[%s245] sm:$0x1]
    %s247 = sld [smem:[#allocation2 + $0x84]]
    %s248 = scalar_lea.vmem [#allocation7], %s247
    %v249 = vld [vmem:[%s248] sm:$0x1]
    %s250 = sld [smem:[#allocation2 + $0x85]]
    %s251 = scalar_lea.vmem [#allocation7], %s250
    %v252 = vld [vmem:[%s251] sm:$0x1]
    %s253 = sld [smem:[#allocation2 + $0x86]]
    %s254 = scalar_lea.vmem [#allocation7], %s253
    %v255 = vld [vmem:[%s254] sm:$0x1]
    %s256 = sld [smem:[#allocation2 + $0x87]]
    %s257 = scalar_lea.vmem [#allocation7], %s256
    %v258 = vld [vmem:[%s257] sm:$0x1]
    %v260 = vrot.slane %v240, 7
    %v263 = vrot.slane %v243, 6
    %v266 = vrot.slane %v246, 5
    %v269 = vrot.slane %v249, 4
    %v272 = vrot.slane %v252, 3
    %v275 = vrot.slane %v255, 2
    %v278 = vrot.slane %v258, 1
    %v280 = vsel %vm150, %v237, %v260
    %v281 = vsel %vm152, %v280, %v263
    %v282 = vsel %vm154, %v281, %v266
    %v283 = vsel %vm156, %v282, %v269
    %v284 = vsel %vm158, %v283, %v272
    %v285 = vsel %vm160, %v284, %v275
    %v286 = vsel %vm162, %v285, %v278
    %287 = vmatprep.subr.mxu0 0.0
    %288 = vmatpush1.msra.mxu0 %v89
    %289 = vmatprep.subr.mxu0 0.0
    %290 = vmatpush1.msra.mxu0 %v90
    %291 = vmatprep.subr.mxu0 0.0
    %292 = vmatpush1.msra.mxu0 %v91
    %293 = vmatprep.subr.mxu0 0.0
    %294 = vmatpush1.msra.mxu0 %v92
    %295 = vmatprep.subr.mxu0 0.0
    %296 = vmatpush1.msra.mxu0 %v93
    %297 = vmatprep.subr.mxu0 0.0
    %298 = vmatpush1.msra.mxu0 %v94
    %299 = vmatprep.subr.mxu0 0.0
    %300 = vmatpush1.msra.mxu0 %v95
    %301 = vmatprep.subr.mxu0 0.0
    %302 = vmatpush1.msra.mxu0 %v96
    %303 = vmatprep.subr.mxu0 0.0
    %304 = vmatpush1.msra.mxu0 %v97
    %305 = vmatprep.subr.mxu0 0.0
    %306 = vmatpush1.msra.mxu0 %v98
    %307 = vmatprep.subr.mxu0 0.0
    %308 = vmatpush1.msra.mxu0 %v99
    %309 = vmatprep.subr.mxu0 0.0
    %310 = vmatpush1.msra.mxu0 %v100
    %311 = vmatprep.subr.mxu0 0.0
    %312 = vmatpush1.msra.mxu0 %v101
    %313 = vmatprep.subr.mxu0 0.0
    %314 = vmatpush1.msra.mxu0 %v102
    %315 = vmatprep.subr.mxu0 0.0
    %316 = vmatpush1.msra.mxu0 %v103
    %317 = vmatprep.subr.mxu0 0.0
    %318 = vmatpush1.msra.mxu0 %v104
    %319 = vmatprep.subr.mxu0 0.0
    %320 = vmatpush1.msra.mxu0 0.0
    %321 = vmatprep.subr.mxu0 0.0
    %322 = vmatpush1.msra.mxu0 0.0
    %323 = vmatprep.subr.mxu0 0.0
    %324 = vmatpush1.msra.mxu0 0.0
    %325 = vmatprep.subr.mxu0 0.0
    %326 = vmatpush1.msra.mxu0 0.0
    %327 = vmatprep.subr.mxu0 0.0
    %328 = vmatpush1.msra.mxu0 0.0
    %329 = vmatprep.subr.mxu0 0.0
    %330 = vmatpush1.msra.mxu0 0.0
    %331 = vmatprep.subr.mxu0 0.0
    %332 = vmatpush1.msra.mxu0 0.0
    %333 = vmatprep.subr.mxu0 0.0
    %334 = vmatpush1.msra.mxu0 0.0
    %335 = vmatprep.subr.mxu0 0.0
    %336 = vmatpush1.msra.mxu0 0.0
    %337 = vmatprep.subr.mxu0 0.0
    %338 = vmatpush1.msra.mxu0 0.0
    %339 = vmatprep.subr.mxu0 0.0
    %340 = vmatpush1.msra.mxu0 0.0
    %341 = vmatprep.subr.mxu0 0.0
    %342 = vmatpush1.msra.mxu0 0.0
    %343 = vmatprep.subr.mxu0 0.0
    %344 = vmatpush1.msra.mxu0 0.0
    %345 = vmatprep.subr.mxu0 0.0
    %346 = vmatpush1.msra.mxu0 0.0
    %347 = vmatprep.subr.mxu0 0.0
    %348 = vmatpush1.msra.mxu0 0.0
    %349 = vmatprep.subr.mxu0 0.0
    %350 = vmatpush1.msra.mxu0 0.0
    %351 = vmatprep.mubr.f32.mxu0 0.0
    %352 = vmatmul.mubr.f32.gmra.mrb[0].mxu0 %v234
    %v353 = vpop.f32.mrb[0].mxu0
    %v354 = vadd.f32 %v286, %v353
    %v355 = vpop.f32.mrb[0].mxu0
    %356 = vdwg.mxu0
    %v357 = vtanh.pop %v354
    %v358 = vld [vmem:[#allocation10] sm:$0xff]
    %v359 = vld [vmem:[#allocation10 + $0x8] sm:$0xff]
    %v360 = vld [vmem:[#allocation10 + $0x10] sm:$0xff]
    %v361 = vld [vmem:[#allocation10 + $0x18] sm:$0xff]
    %v362 = vld [vmem:[#allocation10 + $0x20] sm:$0xff]
    %v363 = vld [vmem:[#allocation10 + $0x28] sm:$0xff]
    %v364 = vld [vmem:[#allocation10 + $0x30] sm:$0xff]
    %v365 = vld [vmem:[#allocation10 + $0x38] sm:$0xff]
    %v366 = vld [vmem:[#allocation10 + $0x40] sm:$0xff]
    %v367 = vld [vmem:[#allocation10 + $0x48] sm:$0xff]
    %v368 = vld [vmem:[#allocation10 + $0x50] sm:$0xff]
    %v369 = vld [vmem:[#allocation10 + $0x58] sm:$0xff]
    %v370 = vld [vmem:[#allocation10 + $0x60] sm:$0xff]
    %v371 = vld [vmem:[#allocation10 + $0x68] sm:$0xff]
    %v372 = vld [vmem:[#allocation10 + $0x70] sm:$0xff]
    %v373 = vld [vmem:[#allocation10 + $0x78] sm:$0xff]
    %v374 = vld [vmem:[%s5] sm:$0x1]
    %v376 = vlaneseq
    %v377 = vshrl.u32 %v376, 7
    %v378 = vsub.s32 0, %v377
    %v379 = vrot.slane %v374, %v378
    %381 = vmatprep.subr.mxu0 0.0
    %382 = vmatpush1.msra.mxu0 %v358
    %383 = vmatprep.subr.mxu0 0.0
    %384 = vmatpush1.msra.mxu0 %v359
    %385 = vmatprep.subr.mxu0 0.0
    %386 = vmatpush1.msra.mxu0 %v360
    %387 = vmatprep.subr.mxu0 0.0
    %388 = vmatpush1.msra.mxu0 %v361
    %389 = vmatprep.subr.mxu0 0.0
    %390 = vmatpush1.msra.mxu0 %v362
    %391 = vmatprep.subr.mxu0 0.0
    %392 = vmatpush1.msra.mxu0 %v363
    %393 = vmatprep.subr.mxu0 0.0
    %394 = vmatpush1.msra.mxu0 %v364
    %395 = vmatprep.subr.mxu0 0.0
    %396 = vmatpush1.msra.mxu0 %v365
    %397 = vmatprep.subr.mxu0 0.0
    %398 = vmatpush1.msra.mxu0 %v366
    %399 = vmatprep.subr.mxu0 0.0
    %400 = vmatpush1.msra.mxu0 %v367
    %401 = vmatprep.subr.mxu0 0.0
    %402 = vmatpush1.msra.mxu0 %v368
    %403 = vmatprep.subr.mxu0 0.0
    %404 = vmatpush1.msra.mxu0 %v369
    %405 = vmatprep.subr.mxu0 0.0
    %406 = vmatpush1.msra.mxu0 %v370
    %407 = vmatprep.subr.mxu0 0.0
    %408 = vmatpush1.msra.mxu0 %v371
    %409 = vmatprep.subr.mxu0 0.0
    %410 = vmatpush1.msra.mxu0 %v372
    %411 = vmatprep.subr.mxu0 0.0
    %412 = vmatpush1.msra.mxu0 %v373
    %413 = vmatprep.subr.mxu0 0.0
    %414 = vmatpush1.msra.mxu0 0.0
    %415 = vmatprep.subr.mxu0 0.0
    %416 = vmatpush1.msra.mxu0 0.0
    %417 = vmatprep.subr.mxu0 0.0
    %418 = vmatpush1.msra.mxu0 0.0
    %419 = vmatprep.subr.mxu0 0.0
    %420 = vmatpush1.msra.mxu0 0.0
    %421 = vmatprep.subr.mxu0 0.0
    %422 = vmatpush1.msra.mxu0 0.0
    %423 = vmatprep.subr.mxu0 0.0
    %424 = vmatpush1.msra.mxu0 0.0
    %425 = vmatprep.subr.mxu0 0.0
    %426 = vmatpush1.msra.mxu0 0.0
    %427 = vmatprep.subr.mxu0 0.0
    %428 = vmatpush1.msra.mxu0 0.0
    %429 = vmatprep.subr.mxu0 0.0
    %430 = vmatpush1.msra.mxu0 0.0
    %431 = vmatprep.subr.mxu0 0.0
    %432 = vmatpush1.msra.mxu0 0.0
    %433 = vmatprep.subr.mxu0 0.0
    %434 = vmatpush1.msra.mxu0 0.0
    %435 = vmatprep.subr.mxu0 0.0
    %436 = vmatpush1.msra.mxu0 0.0
    %437 = vmatprep.subr.mxu0 0.0
    %438 = vmatpush1.msra.mxu0 0.0
    %439 = vmatprep.subr.mxu0 0.0
    %440 = vmatpush1.msra.mxu0 0.0
    %441 = vmatprep.subr.mxu0 0.0
    %442 = vmatpush1.msra.mxu0 0.0
    %443 = vmatprep.subr.mxu0 0.0
    %444 = vmatpush1.msra.mxu0 0.0
    %445 = vmatprep.mubr.f32.mxu0 0.0
    %446 = vmatmul.mubr.f32.gmra.mrb[0].mxu0 %v357
    %v447 = vpop.f32.mrb[0].mxu0
    %v448 = vadd.f32 %v379, %v447
    %v449 = vpop.f32.mrb[0].mxu0
    %450 = vdwg.mxu0
    %451 = vst [vmem:[#allocation12] sm:$0xff] %v448
    // Predicated region
    $region46: #{tpu_custom_call.1} parent=1 // pred_check
      _
    $region47: #{tpu_custom_call.1} parent=1 // pred_check_branch
      %453 = sbr.rel (0) target = $region49
    $region48: #{tpu_custom_call.1} parent=1 // pred_region
      %s455 = ssub.s32 128, 128
      %456 = vsyncadd [#allocation4], %s455
      %s458 = sshll.u32 [#allocation12], 4
      %s459 = int_to_ptr.vmem [resolvable:$true] %s458
      %461 = dma.vmem_to_hbm [thread:$0]  %s459, 128, %s6, [#allocation4]
    $region49: #{tpu_custom_call.1} parent=1 // pred_fallthru
      _
    // Predicated region
    $region50: #{tpu_custom_call.1} parent=1 // pred_check
      _
    $region51: #{tpu_custom_call.1} parent=1 // pred_check_branch
      %463 = sbr.rel (0) target = $region53
    $region52: #{tpu_custom_call.1} parent=1 // pred_region
      %464 = dma.done [#allocation4], 128
    $region53: #{tpu_custom_call.1} parent=1 // pred_fallthru
      _
    %465 = vsyncpa [#allocation3], 1
    %466 = vsyncpa [#allocation8], 1
    %467 = vsyncpa [#allocation11], 1
    %468 = vsyncpa [#allocation4], 1
    %469 = vsyncpa [#allocation5], 1

</llo_original>
